<compile_context>
chip_gen: v5e
topology: v5e:2x2
jax: 0.10.0
libtpu: 0.0.40
codegen_flags: <defaults>
</compile_context>

<pallas_src>
import functools
import math

import jax
import jax.numpy as jnp
from jax import lax
from jax.experimental import pallas as pl
from jax.experimental.pallas import tpu as pltpu


_LOG_CLAMP_MAX = math.log(1.0e4)  # == -log(1e-4); reproduces prob.clamp(min=1e-4)


def _ce_loss_kernel(pred_ref, tgt_ref, alpha_ref, nll_ref, *, use_alpha):
    # pred_ref:  (TB, C) f32     tgt_ref: (TB, 1) i32
    # alpha_ref: (1, C)  f32     nll_ref: (TB, 1) f32  (per-row loss, this tile)
    logits = pred_ref[...]
    tgt = tgt_ref[...]
    tb, c = logits.shape

    # Fused log-softmax for the target class only (log-sum-exp form):
    #   -log(clamp(softmax(x)_y, 1e-4, 1.0)) == clip(lse(x) - x_y, 0, log(1e4))
    m = jnp.max(logits, axis=1, keepdims=True)
    lse = m + jnp.log(jnp.sum(jnp.exp(logits - m), axis=1, keepdims=True))

    # one-hot "scatter_" of the integer targets (mask, never materialized as f32*C math)
    cls = lax.broadcasted_iota(jnp.int32, (tb, c), 1)
    onehot = cls == tgt                                          # (TB, C) bool
    logit_y = jnp.sum(jnp.where(onehot, logits, 0.0), axis=1, keepdims=True)

    nll = jnp.clip(lse - logit_y, 0.0, _LOG_CLAMP_MAX)           # (TB, 1)

    if use_alpha:
        # per-row alpha gather instead of a (TB, C) multiply
        alpha_y = jnp.sum(jnp.where(onehot, alpha_ref[...], 0.0),
                          axis=1, keepdims=True)
        nll = nll * alpha_y

    nll_ref[...] = nll


def _vmem_capacity_bytes():
    try:
        return int(pltpu.get_tpu_info().vmem_capacity_bytes)
    except Exception:
        return 64 << 20  # conservative fallback (v7x per-TensorCore VMEM)


def _pick_block_rows(n, c, vmem_cap):
    """Largest row tile whose double-buffered working set fits a VMEM budget."""
    c_pad = -(-c // 128) * 128
    # per row, double-buffered: pred (c_pad lanes) + target (padded to 128 lanes)
    # + per-row output (padded to 128 lanes), 4 B each.
    per_row = 2 * 4 * (c_pad + 128 + 128)
    budget = vmem_cap // 4            # headroom for compiler temps / scratch
    rows = budget // per_row
    rows = max(8, min(rows, 2048))    # >=512-row tiles already hit ~85% of HBM roofline
    rows -= rows % 8
    n8 = max(8, -(-n // 8) * 8)       # no point tiling larger than the problem
    rows = min(rows, n8)
    return max(8, rows - rows % 8)


def ce_loss(pred, target, *, class_num, alpha=None, use_alpha=False,
            size_average=False, block_rows=None):
    """Pallas equivalent of CELoss.forward.

    pred:   (..., class_num) float logits (flattened to (-1, class_num))
    target: (N,) integer class labels
    """
    pred = jnp.asarray(pred, jnp.float32).reshape(-1, class_num)
    n, c = pred.shape
    tgt = jnp.asarray(target, jnp.int32).reshape(-1, 1)

    vmem_cap = _vmem_capacity_bytes()
    if block_rows is None:
        block_rows = _pick_block_rows(n, c, vmem_cap)
    block_rows = max(8, block_rows - block_rows % 8)

    # pad rows so N is a multiple of the tile; padded rows are sliced off below
    n_pad = -(-n // block_rows) * block_rows
    if n_pad != n:
        pred = jnp.pad(pred, ((0, n_pad - n), (0, 0)))
        tgt = jnp.pad(tgt, ((0, n_pad - n), (0, 0)))

    if alpha is None:
        alpha_arr = jnp.ones((1, c), jnp.float32)
    else:
        alpha_arr = jnp.asarray(alpha, jnp.float32).reshape(1, c)

    num_tiles = n_pad // block_rows
    kernel = functools.partial(_ce_loss_kernel, use_alpha=use_alpha)

    # explicit VMEM limit: big enough for the chosen tile, but below physical
    # capacity on every generation (v5e default scoped limit is only 16 MiB).
    c_pad = -(-c // 128) * 128
    working = 2 * 4 * block_rows * (c_pad + 256)
    vmem_limit = int(min(vmem_cap * 3 // 4, max(32 << 20, 2 * working)))

    per_row = pl.pallas_call(
        kernel,
        out_shape=jax.ShapeDtypeStruct((n_pad, 1), jnp.float32),
        grid_spec=pltpu.PrefetchScalarGridSpec(
            num_scalar_prefetch=0,
            grid=(num_tiles,),
            in_specs=[
                pl.BlockSpec((block_rows, c), lambda i: (i, 0)),   # pred tile
                pl.BlockSpec((block_rows, 1), lambda i: (i, 0)),   # target tile
                pl.BlockSpec((1, c), lambda i: (0, 0)),            # alpha (shared)
            ],
            out_specs=pl.BlockSpec((block_rows, 1), lambda i: (i, 0)),
        ),
        compiler_params=pltpu.CompilerParams(
            dimension_semantics=("parallel",),     # each tile owns its output block
            vmem_limit_bytes=vmem_limit),
    )(pred, tgt, alpha_arr)

    loss = jnp.sum(per_row[:n])
    if size_average:
        loss = loss / jnp.float32(n)
    return loss


def _ce_loss_ref(pred, target, class_num, alpha=None, use_alpha=False,
                 size_average=False):
    pred = pred.reshape(-1, class_num)
    prob = jax.nn.softmax(pred, axis=1)
    prob = jnp.clip(prob, 0.0001, 1.0)
    onehot = jax.nn.one_hot(target.reshape(-1), class_num, dtype=jnp.float32)
    nlp = -jnp.log(prob)
    if use_alpha:
        nlp = nlp * jnp.asarray(alpha, jnp.float32)[None, :]
    batch_loss = jnp.sum(nlp * onehot, axis=1)
    return jnp.mean(batch_loss) if size_average else jnp.sum(batch_loss)


if __name__ == "__main__":
    key = jax.random.PRNGKey(0)
    k1, k2 = jax.random.split(key)

    N, C = 16, 8                                   # small shapes: batch=16, class_num=8
    pred = jax.random.normal(k1, (N, C), dtype=jnp.float32)
    target = jax.random.randint(k2, (N,), 0, C, dtype=jnp.int32)

    # default CELoss(class_num=C): use_alpha=False, size_average=False
    out = jax.block_until_ready(ce_loss(pred, target, class_num=C))
    ref = _ce_loss_ref(pred, target, C)
    assert jnp.allclose(out, ref, rtol=2e-5, atol=1e-5), (out, ref)

    # alpha-weighted + size_average path
    alpha = [0.5 + 0.1 * i for i in range(C)]
    out_a = jax.block_until_ready(
        ce_loss(pred, target, class_num=C, alpha=alpha, use_alpha=True,
                size_average=True))
    ref_a = _ce_loss_ref(pred, target, C, alpha=alpha, use_alpha=True,
                         size_average=True)
    assert jnp.allclose(out_a, ref_a, rtol=2e-5, atol=1e-5), (out_a, ref_a)

    # multi-tile + row-padding path (N not a multiple of the tile)
    k3, k4 = jax.random.split(k1)
    N2 = 1000
    pred2 = jax.random.normal(k3, (N2, C), dtype=jnp.float32)
    target2 = jax.random.randint(k4, (N2,), 0, C, dtype=jnp.int32)
    out2 = jax.block_until_ready(
        ce_loss(pred2, target2, class_num=C, block_rows=128))
    ref2 = _ce_loss_ref(pred2, target2, C)
    assert jnp.allclose(out2, ref2, rtol=2e-5, atol=1e-5), (out2, ref2)

    print("KERNEL_OK")
</pallas_src>

<mosaic_0001>
module attributes {stable_mosaic.version = 11 : i64} {
  func.func @_ce_loss_kernel(%arg0: i32, %arg1: memref<16x8xf32, #tpu.memory_space<vmem>>, %arg2: memref<16x1xi32, #tpu.memory_space<vmem>>, %arg3: memref<1x8xf32, #tpu.memory_space<vmem>>, %arg4: memref<16x1xf32, #tpu.memory_space<vmem>>) attributes {dimension_semantics = [#tpu.dimension_semantics<parallel>], iteration_bounds = array<i64: 1>, scalar_prefetch = 0 : i64, scratch_operands = 0 : i64, tpu.core_type = #tpu.core_type<tc>, window_params = [{transform_indices = @transform_0, window_bounds = array<i64: 16, 8>}, {transform_indices = @transform_1, window_bounds = array<i64: 16, 1>}, {pipeline_mode = #tpu.pipeline_mode<synchronous>, transform_indices = @transform_2, window_bounds = array<i64: 1, 8>}, {transform_indices = @transform_3, window_bounds = array<i64: 16, 1>}]} {
    %c0 = arith.constant 0 : index
    %c0_0 = arith.constant 0 : index
    %0 = vector.load %arg1[%c0, %c0_0] : memref<16x8xf32, #tpu.memory_space<vmem>>, vector<16x8xf32>
    %c0_1 = arith.constant 0 : index
    %c0_2 = arith.constant 0 : index
    %1 = vector.load %arg2[%c0_1, %c0_2] : memref<16x1xi32, #tpu.memory_space<vmem>>, vector<16x1xi32>
    %cst = arith.constant dense<0xFF800000> : vector<16xf32>
    %2 = vector.multi_reduction <maximumf>, %0, %cst [1] : vector<16x8xf32> to vector<16xf32>
    %3 = vector.shape_cast %2 : vector<16xf32> to vector<16x1xf32>
    %4 = vector.broadcast %3 : vector<16x1xf32> to vector<16x8xf32>
    %5 = arith.subf %0, %4 : vector<16x8xf32>
    %6 = math.exp %5 : vector<16x8xf32>
    %cst_3 = arith.constant dense<0.000000e+00> : vector<16xf32>
    %7 = vector.multi_reduction <add>, %6, %cst_3 [1] : vector<16x8xf32> to vector<16xf32>
    %8 = vector.shape_cast %7 : vector<16xf32> to vector<16x1xf32>
    %9 = math.log %8 : vector<16x1xf32>
    %10 = arith.addf %3, %9 : vector<16x1xf32>
    %11 = tpu.iota {dimensions = array<i32: 1>} : vector<16x8xi32>
    %12 = vector.broadcast %1 : vector<16x1xi32> to vector<16x8xi32>
    %13 = arith.cmpi eq, %11, %12 : vector<16x8xi32>
    %cst_4 = arith.constant 0.000000e+00 : f32
    %14 = vector.broadcast %cst_4 : f32 to vector<16x8xf32>
    %15 = arith.select %13, %0, %14 : vector<16x8xi1>, vector<16x8xf32>
    %cst_5 = arith.constant dense<0.000000e+00> : vector<16xf32>
    %16 = vector.multi_reduction <add>, %15, %cst_5 [1] : vector<16x8xf32> to vector<16xf32>
    %17 = vector.shape_cast %16 : vector<16xf32> to vector<16x1xf32>
    %18 = arith.subf %10, %17 : vector<16x1xf32>
    %cst_6 = arith.constant 0.000000e+00 : f32
    %cst_7 = arith.constant 9.21034049 : f32
    %19 = vector.broadcast %cst_6 : f32 to vector<16x1xf32>
    %20 = arith.maximumf %19, %18 : vector<16x1xf32>
    %21 = vector.broadcast %cst_7 : f32 to vector<16x1xf32>
    %22 = arith.minimumf %21, %20 : vector<16x1xf32>
    %c0_8 = arith.constant 0 : index
    %c0_9 = arith.constant 0 : index
    %23 = vector.load %arg4[%c0_8, %c0_9] : memref<16x1xf32, #tpu.memory_space<vmem>>, vector<16x1xf32>
    tpu.vector_store %arg4[%c0_8, %c0_9], %22 {strides = array<i32>} : memref<16x1xf32, #tpu.memory_space<vmem>>, vector<16x1xf32>,
    return
  }
  func.func @transform_0(%arg0: i32) -> (i32, i32) {
    %c0_i32 = arith.constant 0 : i32
    %c0_i32_0 = arith.constant 0 : i32
    return %arg0, %c0_i32 : i32, i32
  }
  func.func @transform_1(%arg0: i32) -> (i32, i32) {
    %c0_i32 = arith.constant 0 : i32
    %c0_i32_0 = arith.constant 0 : i32
    return %arg0, %c0_i32 : i32, i32
  }
  func.func @transform_2(%arg0: i32) -> (i32, i32) {
    %c0_i32 = arith.constant 0 : i32
    %c0_i32_0 = arith.constant 0 : i32
    %c0_i32_1 = arith.constant 0 : i32
    return %c0_i32, %c0_i32_0 : i32, i32
  }
  func.func @transform_3(%arg0: i32) -> (i32, i32) {
    %c0_i32 = arith.constant 0 : i32
    %c0_i32_0 = arith.constant 0 : i32
    return %arg0, %c0_i32 : i32, i32
  }
}

</mosaic_0001>

<llo_original>
// kernel: tpu_custom_call.1
$region0: #{tpu_custom_call.1}
  #allocation0 [shape = 'u32[]', space=smem, size = 0x4, offset = 0x4, fixed_abs, tag = 'smem constant byte address 0x4 - core index']
  #allocation1 [shape = 'u32[72,128]{1,0:T(1,128)}', space=vmem, size = 0x9000, scoped, tag = 'internal scratch']
  %s0 = inlined_call_operand.vmem [shape: f32[16,8], index: 0, kind: input, shape index: {}]
  %s1 = inlined_call_operand.vmem [shape: s32[16,1], index: 1, kind: input, shape index: {}]
  %s2 = inlined_call_operand.vmem [shape: f32[1,8], index: 2, kind: input, shape index: {}]
  %s3 = inlined_call_operand.vmem [shape: f32[16,1], index: 3, kind: output, shape index: {}]
  %s4 = sld [smem:[#allocation0]]
  $region22: #{tpu_custom_call.1} parent=0
    _
  %s6 = ssub.s32 1, %s4
  %s7 = scalar_select 0, %s6, %s4
  // Predicated region
  $region2: #{tpu_custom_call.1} parent=0 // pred_check
    _
  $region3: #{tpu_custom_call.1} parent=0 // pred_check_branch
    %9 = sbr.rel (0) target = $region5
  $region4: #{tpu_custom_call.1} parent=0 // pred_region
    _
  $region5: #{tpu_custom_call.1} parent=0 // pred_fallthru
    _
  // Predicated region
  $region6: #{tpu_custom_call.1} parent=0 // pred_check
    _
  $region7: #{tpu_custom_call.1} parent=0 // pred_check_branch
    %11 = sbr.rel (0) target = $region9
  $region8: #{tpu_custom_call.1} parent=0 // pred_region
    _
  $region9: #{tpu_custom_call.1} parent=0 // pred_fallthru
    _
  // Predicated region
  $region10: #{tpu_custom_call.1} parent=0 // pred_check
    _
  $region11: #{tpu_custom_call.1} parent=0 // pred_check_branch
    %13 = sbr.rel (0) target = $region13
  $region12: #{tpu_custom_call.1} parent=0 // pred_region
    _
  $region13: #{tpu_custom_call.1} parent=0 // pred_fallthru
    _
  %v14 = vld [vmem:[%s0] sm:$0xff]
  %v15 = vld [vmem:[%s0 + $0x8] sm:$0xff]
  %v16 = vld [vmem:[%s1] sm:$0xff]
  %v17 = vld [vmem:[%s1 + $0x8] sm:$0xff]
  %vm18 = vcmask 64512
  %v19 = vsel %vm18, %v14, -inf
  %20 = vmax.xlane.f32.xlu0 %v19
  %v21 = vpop.xlane.xlu0 %20
  %v22 = vsel %vm18, %v15, -inf
  %23 = vmax.xlane.f32.xlu0 %v22
  %v24 = vpop.xlane.xlu0 %23
  %v25 = vsub.f32 %v14, %v21
  %v26 = vsub.f32 %v15, %v24
  %v27 = vmul.f32 %v25, 1.442695
  %v28 = vpow.pop %v27
  %v29 = vmul.f32 %v26, 1.442695
  %v30 = vpow.pop %v29
  %v31 = vsel %vm18, %v28, 0.0
  %32 = vadd.xlane.f32.xlu0 %v31
  %v33 = vpop.xlane.xlu0 %32
  %v34 = vsel %vm18, %v30, 0.0
  %35 = vadd.xlane.f32.xlu0 %v34
  %v36 = vpop.xlane.xlu0 %35
  %v37 = vlog2.pop %v33
  %v38 = vmul.f32 %v37, 0.6931472
  %v39 = vlog2.pop %v36
  %v40 = vmul.f32 %v39, 0.6931472
  %v41 = vadd.f32 %v21, %v38
  %v42 = vadd.f32 %v24, %v40
  %v43 = vlaneseq
  %v44 = vand.u32 %v43, 127
  %45 = vset.pattern.permute.xlu0 0
  %46 = vperm.xlu0 %45, %v16
  %v47 = vpop.permute.xlu0 %46
  %48 = vset.pattern.permute.xlu0 0
  %49 = vperm.xlu0 %48, %v17
  %v50 = vpop.permute.xlu0 %49
  %vm51 = vcmp.eq.s32.totalorder %v44, %v47
  %vm52 = vcmp.eq.s32.totalorder %v44, %v50
  %v53 = vsel %vm51, %v14, 0.0
  %v54 = vsel %vm52, %v15, 0.0
  %v55 = vsel %vm18, %v53, 0.0
  %56 = vadd.xlane.f32.xlu0 %v55
  %v57 = vpop.xlane.xlu0 %56
  %v58 = vsel %vm18, %v54, 0.0
  %59 = vadd.xlane.f32.xlu0 %v58
  %v60 = vpop.xlane.xlu0 %59
  %v61 = vsub.f32 %v41, %v57
  %v62 = vsub.f32 %v42, %v60
  %v63 = vmax.f32 %v61, 0.0
  %v64 = vmax.f32 %v62, 0.0
  %v65 = vmin.f32 %v63, 9.2103405
  %v66 = vmin.f32 %v64, 9.2103405
  %vm67 = vcmask 7168
  %68 = vst.msk [vmem:[%s3] sm:$0xff] %vm67, %v65
  %69 = vst.msk [vmem:[%s3 + $0x8] sm:$0xff] %vm67, %v66
  // Predicated region
  $region14: #{tpu_custom_call.1} parent=0 // pred_check
    _
  $region15: #{tpu_custom_call.1} parent=0 // pred_check_branch
    %71 = sbr.rel (0) target = $region17
  $region16: #{tpu_custom_call.1} parent=0 // pred_region
    _
  $region17: #{tpu_custom_call.1} parent=0 // pred_fallthru
    _
  // Predicated region
  $region18: #{tpu_custom_call.1} parent=0 // pred_check
    _
  $region19: #{tpu_custom_call.1} parent=0 // pred_check_branch
    %73 = sbr.rel (0) target = $region21
  $region20: #{tpu_custom_call.1} parent=0 // pred_region
    _
  $region21: #{tpu_custom_call.1} parent=0 // pred_fallthru
    _

</llo_original>
